<compile_context>
chip_gen: v5e
topology: v5e:2x2
jax: 0.10.0
libtpu: 0.0.40
codegen_flags: <defaults>
</compile_context>

<pallas_src>
import jax
import jax.numpy as jnp
from jax.experimental import pallas as pl
from jax.experimental.pallas import tpu as pltpu


def _round_up(a, b):
    return (a + b - 1) // b * b


def mlp_kernel(xt_ref, w1_ref, b1_ref, w2_ref, b2_ref, o_ref):
    """One (3, S, 128) tile of x (feature-major) -> one (S, 128) output tile.

    w1_ref (24,), b1_ref (8,), w2_ref (8,), b2_ref (1,) are SMEM scalar
    tables; every multiply-add below is a VPU op over full (S, 128) vregs.
    """
    x0 = xt_ref[0]  # (S, 128) plane for input feature 0
    x1 = xt_ref[1]
    x2 = xt_ref[2]

    acc = None
    for j in range(8):  # fc1 output unit j, ReLU, then its fc2 contribution
        h = (x0 * w1_ref[0 * 8 + j]
             + x1 * w1_ref[1 * 8 + j]
             + x2 * w1_ref[2 * 8 + j]
             + b1_ref[j])
        h = jnp.maximum(h, 0.0)
        term = h * w2_ref[j]
        acc = term if acc is None else acc + term

    o_ref[...] = (acc + b2_ref[0]).astype(o_ref.dtype)


def simple_model_forward(x, w1, b1, w2, b2, *, tile_b=256 * 1024):
    """relu(x @ w1 + b1) @ w2 + b2  ->  (B, 1) float32.

    x: (B, 3); w1: (3, 8); b1: (8,); w2: (8, 1); b2: (1,).
    """
    B = x.shape[0]

    # --- layout plumbing: batch -> (rows, 128) sublane/lane-dense slab ------
    # TODO(synk): ideally the producer hands us feature-major (3, rows, 128)
    # data directly; the pad + transpose below is one extra fused XLA copy
    # pass over x that a layout change upstream would eliminate (~2x HBM).
    B_pad = _round_up(B, 8 * 128)           # lane(128) x sublane(8) alignment
    xf = x.astype(jnp.float32)
    if B_pad != B:
        xf = jnp.pad(xf, ((0, B_pad - B), (0, 0)))
    rows = B_pad // 128
    xt = xf.T.reshape(3, rows, 128)         # (3, rows, 128)

    w1f = w1.astype(jnp.float32).reshape(-1)  # (24,)  w1[k, j] -> k*8 + j
    b1f = b1.astype(jnp.float32).reshape(-1)  # (8,)
    w2f = w2.astype(jnp.float32).reshape(-1)  # (8,)
    b2f = b2.astype(jnp.float32).reshape(-1)  # (1,)

    # --- tile selection ------------------------------------------------------
    # S = sublane-rows per grid step (multiple of 8). Large to amortize the
    # per-step overhead, but capped so the grid has >= 2 steps when possible
    # (v7x megacore) and so double-buffering fits every generation's VMEM.
    s_target = max(8, (tile_b // 128) // 8 * 8)          # from requested tile
    s_half = max(8, _round_up(pl.cdiv(rows, 2), 8))      # >= 2 grid steps
    S = min(s_target, s_half, rows)
    grid = (pl.cdiv(rows, S),)

    # Explicit scoped-VMEM budget: one input tile (3,S,128) + one output tile
    # (S,128), f32, double-buffered, plus headroom.  Capped at 64 MiB (v7x).
    per_step_bytes = (3 + 1) * S * 128 * 4
    vmem_limit = max(32 << 20, min(4 * per_step_bytes + (2 << 20), 64 << 20))

    smem_spec = pl.BlockSpec(memory_space=pltpu.MemorySpace.SMEM)

    out = pl.pallas_call(
        mlp_kernel,
        out_shape=jax.ShapeDtypeStruct((rows, 128), jnp.float32),
        grid=grid,
        in_specs=[
            pl.BlockSpec((3, S, 128), lambda i: (0, i, 0)),  # x tile (VMEM)
            smem_spec,  # w1 scalars
            smem_spec,  # b1 scalars
            smem_spec,  # w2 scalars
            smem_spec,  # b2 scalar
        ],
        out_specs=pl.BlockSpec((S, 128), lambda i: (i, 0)),
        compiler_params=pltpu.CompilerParams(
            dimension_semantics=("parallel",),
            vmem_limit_bytes=int(vmem_limit),
        ),
    )(xt, w1f, b1f, w2f, b2f)

    return out.reshape(B_pad)[:B].reshape(B, 1)


def init_params(key):
    # Deterministic init mimicking PyTorch nn.Linear default:
    # U(-1/sqrt(fan_in), 1/sqrt(fan_in)) for both weight and bias.
    k1, k2, k3, k4 = jax.random.split(key, 4)
    bound1 = 1.0 / jnp.sqrt(3.0)
    bound2 = 1.0 / jnp.sqrt(8.0)
    w1 = jax.random.uniform(k1, (3, 8), jnp.float32, -bound1, bound1)  # fc1.weight.T
    b1 = jax.random.uniform(k2, (8,), jnp.float32, -bound1, bound1)    # fc1.bias
    w2 = jax.random.uniform(k3, (8, 1), jnp.float32, -bound2, bound2)  # fc2.weight.T
    b2 = jax.random.uniform(k4, (1,), jnp.float32, -bound2, bound2)    # fc2.bias
    return w1, b1, w2, b2


if __name__ == "__main__":
    key = jax.random.PRNGKey(0)
    kx, kp = jax.random.split(key)

    # Small, but intentionally NOT a multiple of 128/1024 so the padded
    # final tile and the multi-step (2-step) grid path are both exercised.
    B = 2000
    x = jax.random.normal(kx, (B, 3), jnp.float32)
    w1, b1, w2, b2 = init_params(kp)

    out = simple_model_forward(x, w1, b1, w2, b2)
    out = jax.block_until_ready(out)

    # Reference check in plain JAX.
    ref = jnp.maximum(x @ w1 + b1, 0.0) @ w2 + b2
    assert out.shape == (B, 1)
    assert jnp.allclose(out, ref, atol=1e-5, rtol=1e-5)

    print("KERNEL_OK")
</pallas_src>

<mosaic_0001>
module attributes {stable_mosaic.version = 11 : i64} {
  func.func @mlp_kernel(%arg0: i32, %arg1: memref<3x8x128xf32, #tpu.memory_space<vmem>>, %arg2: memref<24xf32, #tpu.memory_space<smem>>, %arg3: memref<8xf32, #tpu.memory_space<smem>>, %arg4: memref<8xf32, #tpu.memory_space<smem>>, %arg5: memref<1xf32, #tpu.memory_space<smem>>, %arg6: memref<8x128xf32, #tpu.memory_space<vmem>>) attributes {dimension_semantics = [#tpu.dimension_semantics<parallel>], iteration_bounds = array<i64: 2>, scalar_prefetch = 0 : i64, scratch_operands = 0 : i64, tpu.core_type = #tpu.core_type<tc>, window_params = [{transform_indices = @transform_0, window_bounds = array<i64: 3, 8, 128>}, {transform_indices = @transform_1, window_bounds = array<i64: 24>}, {transform_indices = @transform_2, window_bounds = array<i64: 8>}, {transform_indices = @transform_3, window_bounds = array<i64: 8>}, {transform_indices = @transform_4, window_bounds = array<i64: 1>}, {transform_indices = @transform_5, window_bounds = array<i64: 8, 128>}]} {
    %c0 = arith.constant 0 : index
    %c0_0 = arith.constant 0 : index
    %c0_1 = arith.constant 0 : index
    %0 = vector.load %arg1[%c0, %c0_0, %c0_1] : memref<3x8x128xf32, #tpu.memory_space<vmem>>, vector<1x8x128xf32>
    %1 = vector.shape_cast %0 : vector<1x8x128xf32> to vector<8x128xf32>
    %c1 = arith.constant 1 : index
    %c0_2 = arith.constant 0 : index
    %c0_3 = arith.constant 0 : index
    %2 = vector.load %arg1[%c1, %c0_2, %c0_3] : memref<3x8x128xf32, #tpu.memory_space<vmem>>, vector<1x8x128xf32>
    %3 = vector.shape_cast %2 : vector<1x8x128xf32> to vector<8x128xf32>
    %c2 = arith.constant 2 : index
    %c0_4 = arith.constant 0 : index
    %c0_5 = arith.constant 0 : index
    %4 = vector.load %arg1[%c2, %c0_4, %c0_5] : memref<3x8x128xf32, #tpu.memory_space<vmem>>, vector<1x8x128xf32>
    %5 = vector.shape_cast %4 : vector<1x8x128xf32> to vector<8x128xf32>
    %c0_6 = arith.constant 0 : index
    %6 = memref.load %arg2[%c0_6] : memref<24xf32, #tpu.memory_space<smem>>
    %7 = vector.broadcast %6 : f32 to vector<8x128xf32>
    %8 = arith.mulf %1, %7 : vector<8x128xf32>
    %c8 = arith.constant 8 : index
    %9 = memref.load %arg2[%c8] : memref<24xf32, #tpu.memory_space<smem>>
    %10 = vector.broadcast %9 : f32 to vector<8x128xf32>
    %11 = arith.mulf %3, %10 : vector<8x128xf32>
    %12 = arith.addf %8, %11 : vector<8x128xf32>
    %c16 = arith.constant 16 : index
    %13 = memref.load %arg2[%c16] : memref<24xf32, #tpu.memory_space<smem>>
    %14 = vector.broadcast %13 : f32 to vector<8x128xf32>
    %15 = arith.mulf %5, %14 : vector<8x128xf32>
    %16 = arith.addf %12, %15 : vector<8x128xf32>
    %c0_7 = arith.constant 0 : index
    %17 = memref.load %arg3[%c0_7] : memref<8xf32, #tpu.memory_space<smem>>
    %18 = vector.broadcast %17 : f32 to vector<8x128xf32>
    %19 = arith.addf %16, %18 : vector<8x128xf32>
    %cst = arith.constant 0.000000e+00 : f32
    %20 = vector.broadcast %cst : f32 to vector<8x128xf32>
    %21 = arith.maximumf %19, %20 : vector<8x128xf32>
    %c0_8 = arith.constant 0 : index
    %22 = memref.load %arg4[%c0_8] : memref<8xf32, #tpu.memory_space<smem>>
    %23 = vector.broadcast %22 : f32 to vector<8x128xf32>
    %24 = arith.mulf %21, %23 : vector<8x128xf32>
    %c1_9 = arith.constant 1 : index
    %25 = memref.load %arg2[%c1_9] : memref<24xf32, #tpu.memory_space<smem>>
    %26 = vector.broadcast %25 : f32 to vector<8x128xf32>
    %27 = arith.mulf %1, %26 : vector<8x128xf32>
    %c9 = arith.constant 9 : index
    %28 = memref.load %arg2[%c9] : memref<24xf32, #tpu.memory_space<smem>>
    %29 = vector.broadcast %28 : f32 to vector<8x128xf32>
    %30 = arith.mulf %3, %29 : vector<8x128xf32>
    %31 = arith.addf %27, %30 : vector<8x128xf32>
    %c17 = arith.constant 17 : index
    %32 = memref.load %arg2[%c17] : memref<24xf32, #tpu.memory_space<smem>>
    %33 = vector.broadcast %32 : f32 to vector<8x128xf32>
    %34 = arith.mulf %5, %33 : vector<8x128xf32>
    %35 = arith.addf %31, %34 : vector<8x128xf32>
    %c1_10 = arith.constant 1 : index
    %36 = memref.load %arg3[%c1_10] : memref<8xf32, #tpu.memory_space<smem>>
    %37 = vector.broadcast %36 : f32 to vector<8x128xf32>
    %38 = arith.addf %35, %37 : vector<8x128xf32>
    %cst_11 = arith.constant 0.000000e+00 : f32
    %39 = vector.broadcast %cst_11 : f32 to vector<8x128xf32>
    %40 = arith.maximumf %38, %39 : vector<8x128xf32>
    %c1_12 = arith.constant 1 : index
    %41 = memref.load %arg4[%c1_12] : memref<8xf32, #tpu.memory_space<smem>>
    %42 = vector.broadcast %41 : f32 to vector<8x128xf32>
    %43 = arith.mulf %40, %42 : vector<8x128xf32>
    %44 = arith.addf %24, %43 : vector<8x128xf32>
    %c2_13 = arith.constant 2 : index
    %45 = memref.load %arg2[%c2_13] : memref<24xf32, #tpu.memory_space<smem>>
    %46 = vector.broadcast %45 : f32 to vector<8x128xf32>
    %47 = arith.mulf %1, %46 : vector<8x128xf32>
    %c10 = arith.constant 10 : index
    %48 = memref.load %arg2[%c10] : memref<24xf32, #tpu.memory_space<smem>>
    %49 = vector.broadcast %48 : f32 to vector<8x128xf32>
    %50 = arith.mulf %3, %49 : vector<8x128xf32>
    %51 = arith.addf %47, %50 : vector<8x128xf32>
    %c18 = arith.constant 18 : index
    %52 = memref.load %arg2[%c18] : memref<24xf32, #tpu.memory_space<smem>>
    %53 = vector.broadcast %52 : f32 to vector<8x128xf32>
    %54 = arith.mulf %5, %53 : vector<8x128xf32>
    %55 = arith.addf %51, %54 : vector<8x128xf32>
    %c2_14 = arith.constant 2 : index
    %56 = memref.load %arg3[%c2_14] : memref<8xf32, #tpu.memory_space<smem>>
    %57 = vector.broadcast %56 : f32 to vector<8x128xf32>
    %58 = arith.addf %55, %57 : vector<8x128xf32>
    %cst_15 = arith.constant 0.000000e+00 : f32
    %59 = vector.broadcast %cst_15 : f32 to vector<8x128xf32>
    %60 = arith.maximumf %58, %59 : vector<8x128xf32>
    %c2_16 = arith.constant 2 : index
    %61 = memref.load %arg4[%c2_16] : memref<8xf32, #tpu.memory_space<smem>>
    %62 = vector.broadcast %61 : f32 to vector<8x128xf32>
    %63 = arith.mulf %60, %62 : vector<8x128xf32>
    %64 = arith.addf %44, %63 : vector<8x128xf32>
    %c3 = arith.constant 3 : index
    %65 = memref.load %arg2[%c3] : memref<24xf32, #tpu.memory_space<smem>>
    %66 = vector.broadcast %65 : f32 to vector<8x128xf32>
    %67 = arith.mulf %1, %66 : vector<8x128xf32>
    %c11 = arith.constant 11 : index
    %68 = memref.load %arg2[%c11] : memref<24xf32, #tpu.memory_space<smem>>
    %69 = vector.broadcast %68 : f32 to vector<8x128xf32>
    %70 = arith.mulf %3, %69 : vector<8x128xf32>
    %71 = arith.addf %67, %70 : vector<8x128xf32>
    %c19 = arith.constant 19 : index
    %72 = memref.load %arg2[%c19] : memref<24xf32, #tpu.memory_space<smem>>
    %73 = vector.broadcast %72 : f32 to vector<8x128xf32>
    %74 = arith.mulf %5, %73 : vector<8x128xf32>
    %75 = arith.addf %71, %74 : vector<8x128xf32>
    %c3_17 = arith.constant 3 : index
    %76 = memref.load %arg3[%c3_17] : memref<8xf32, #tpu.memory_space<smem>>
    %77 = vector.broadcast %76 : f32 to vector<8x128xf32>
    %78 = arith.addf %75, %77 : vector<8x128xf32>
    %cst_18 = arith.constant 0.000000e+00 : f32
    %79 = vector.broadcast %cst_18 : f32 to vector<8x128xf32>
    %80 = arith.maximumf %78, %79 : vector<8x128xf32>
    %c3_19 = arith.constant 3 : index
    %81 = memref.load %arg4[%c3_19] : memref<8xf32, #tpu.memory_space<smem>>
    %82 = vector.broadcast %81 : f32 to vector<8x128xf32>
    %83 = arith.mulf %80, %82 : vector<8x128xf32>
    %84 = arith.addf %64, %83 : vector<8x128xf32>
    %c4 = arith.constant 4 : index
    %85 = memref.load %arg2[%c4] : memref<24xf32, #tpu.memory_space<smem>>
    %86 = vector.broadcast %85 : f32 to vector<8x128xf32>
    %87 = arith.mulf %1, %86 : vector<8x128xf32>
    %c12 = arith.constant 12 : index
    %88 = memref.load %arg2[%c12] : memref<24xf32, #tpu.memory_space<smem>>
    %89 = vector.broadcast %88 : f32 to vector<8x128xf32>
    %90 = arith.mulf %3, %89 : vector<8x128xf32>
    %91 = arith.addf %87, %90 : vector<8x128xf32>
    %c20 = arith.constant 20 : index
    %92 = memref.load %arg2[%c20] : memref<24xf32, #tpu.memory_space<smem>>
    %93 = vector.broadcast %92 : f32 to vector<8x128xf32>
    %94 = arith.mulf %5, %93 : vector<8x128xf32>
    %95 = arith.addf %91, %94 : vector<8x128xf32>
    %c4_20 = arith.constant 4 : index
    %96 = memref.load %arg3[%c4_20] : memref<8xf32, #tpu.memory_space<smem>>
    %97 = vector.broadcast %96 : f32 to vector<8x128xf32>
    %98 = arith.addf %95, %97 : vector<8x128xf32>
    %cst_21 = arith.constant 0.000000e+00 : f32
    %99 = vector.broadcast %cst_21 : f32 to vector<8x128xf32>
    %100 = arith.maximumf %98, %99 : vector<8x128xf32>
    %c4_22 = arith.constant 4 : index
    %101 = memref.load %arg4[%c4_22] : memref<8xf32, #tpu.memory_space<smem>>
    %102 = vector.broadcast %101 : f32 to vector<8x128xf32>
    %103 = arith.mulf %100, %102 : vector<8x128xf32>
    %104 = arith.addf %84, %103 : vector<8x128xf32>
    %c5 = arith.constant 5 : index
    %105 = memref.load %arg2[%c5] : memref<24xf32, #tpu.memory_space<smem>>
    %106 = vector.broadcast %105 : f32 to vector<8x128xf32>
    %107 = arith.mulf %1, %106 : vector<8x128xf32>
    %c13 = arith.constant 13 : index
    %108 = memref.load %arg2[%c13] : memref<24xf32, #tpu.memory_space<smem>>
    %109 = vector.broadcast %108 : f32 to vector<8x128xf32>
    %110 = arith.mulf %3, %109 : vector<8x128xf32>
    %111 = arith.addf %107, %110 : vector<8x128xf32>
    %c21 = arith.constant 21 : index
    %112 = memref.load %arg2[%c21] : memref<24xf32, #tpu.memory_space<smem>>
    %113 = vector.broadcast %112 : f32 to vector<8x128xf32>
    %114 = arith.mulf %5, %113 : vector<8x128xf32>
    %115 = arith.addf %111, %114 : vector<8x128xf32>
    %c5_23 = arith.constant 5 : index
    %116 = memref.load %arg3[%c5_23] : memref<8xf32, #tpu.memory_space<smem>>
    %117 = vector.broadcast %116 : f32 to vector<8x128xf32>
    %118 = arith.addf %115, %117 : vector<8x128xf32>
    %cst_24 = arith.constant 0.000000e+00 : f32
    %119 = vector.broadcast %cst_24 : f32 to vector<8x128xf32>
    %120 = arith.maximumf %118, %119 : vector<8x128xf32>
    %c5_25 = arith.constant 5 : index
    %121 = memref.load %arg4[%c5_25] : memref<8xf32, #tpu.memory_space<smem>>
    %122 = vector.broadcast %121 : f32 to vector<8x128xf32>
    %123 = arith.mulf %120, %122 : vector<8x128xf32>
    %124 = arith.addf %104, %123 : vector<8x128xf32>
    %c6 = arith.constant 6 : index
    %125 = memref.load %arg2[%c6] : memref<24xf32, #tpu.memory_space<smem>>
    %126 = vector.broadcast %125 : f32 to vector<8x128xf32>
    %127 = arith.mulf %1, %126 : vector<8x128xf32>
    %c14 = arith.constant 14 : index
    %128 = memref.load %arg2[%c14] : memref<24xf32, #tpu.memory_space<smem>>
    %129 = vector.broadcast %128 : f32 to vector<8x128xf32>
    %130 = arith.mulf %3, %129 : vector<8x128xf32>
    %131 = arith.addf %127, %130 : vector<8x128xf32>
    %c22 = arith.constant 22 : index
    %132 = memref.load %arg2[%c22] : memref<24xf32, #tpu.memory_space<smem>>
    %133 = vector.broadcast %132 : f32 to vector<8x128xf32>
    %134 = arith.mulf %5, %133 : vector<8x128xf32>
    %135 = arith.addf %131, %134 : vector<8x128xf32>
    %c6_26 = arith.constant 6 : index
    %136 = memref.load %arg3[%c6_26] : memref<8xf32, #tpu.memory_space<smem>>
    %137 = vector.broadcast %136 : f32 to vector<8x128xf32>
    %138 = arith.addf %135, %137 : vector<8x128xf32>
    %cst_27 = arith.constant 0.000000e+00 : f32
    %139 = vector.broadcast %cst_27 : f32 to vector<8x128xf32>
    %140 = arith.maximumf %138, %139 : vector<8x128xf32>
    %c6_28 = arith.constant 6 : index
    %141 = memref.load %arg4[%c6_28] : memref<8xf32, #tpu.memory_space<smem>>
    %142 = vector.broadcast %141 : f32 to vector<8x128xf32>
    %143 = arith.mulf %140, %142 : vector<8x128xf32>
    %144 = arith.addf %124, %143 : vector<8x128xf32>
    %c7 = arith.constant 7 : index
    %145 = memref.load %arg2[%c7] : memref<24xf32, #tpu.memory_space<smem>>
    %146 = vector.broadcast %145 : f32 to vector<8x128xf32>
    %147 = arith.mulf %1, %146 : vector<8x128xf32>
    %c15 = arith.constant 15 : index
    %148 = memref.load %arg2[%c15] : memref<24xf32, #tpu.memory_space<smem>>
    %149 = vector.broadcast %148 : f32 to vector<8x128xf32>
    %150 = arith.mulf %3, %149 : vector<8x128xf32>
    %151 = arith.addf %147, %150 : vector<8x128xf32>
    %c23 = arith.constant 23 : index
    %152 = memref.load %arg2[%c23] : memref<24xf32, #tpu.memory_space<smem>>
    %153 = vector.broadcast %152 : f32 to vector<8x128xf32>
    %154 = arith.mulf %5, %153 : vector<8x128xf32>
    %155 = arith.addf %151, %154 : vector<8x128xf32>
    %c7_29 = arith.constant 7 : index
    %156 = memref.load %arg3[%c7_29] : memref<8xf32, #tpu.memory_space<smem>>
    %157 = vector.broadcast %156 : f32 to vector<8x128xf32>
    %158 = arith.addf %155, %157 : vector<8x128xf32>
    %cst_30 = arith.constant 0.000000e+00 : f32
    %159 = vector.broadcast %cst_30 : f32 to vector<8x128xf32>
    %160 = arith.maximumf %158, %159 : vector<8x128xf32>
    %c7_31 = arith.constant 7 : index
    %161 = memref.load %arg4[%c7_31] : memref<8xf32, #tpu.memory_space<smem>>
    %162 = vector.broadcast %161 : f32 to vector<8x128xf32>
    %163 = arith.mulf %160, %162 : vector<8x128xf32>
    %164 = arith.addf %144, %163 : vector<8x128xf32>
    %c0_32 = arith.constant 0 : index
    %165 = memref.load %arg5[%c0_32] : memref<1xf32, #tpu.memory_space<smem>>
    %166 = vector.broadcast %165 : f32 to vector<8x128xf32>
    %167 = arith.addf %164, %166 : vector<8x128xf32>
    %c0_33 = arith.constant 0 : index
    %c0_34 = arith.constant 0 : index
    %168 = vector.load %arg6[%c0_33, %c0_34] : memref<8x128xf32, #tpu.memory_space<vmem>>, vector<8x128xf32>
    tpu.vector_store %arg6[%c0_33, %c0_34], %167 {strides = array<i32>} : memref<8x128xf32, #tpu.memory_space<vmem>>, vector<8x128xf32>,
    return
  }
  func.func @transform_0(%arg0: i32) -> (i32, i32, i32) {
    %c0_i32 = arith.constant 0 : i32
    %c0_i32_0 = arith.constant 0 : i32
    %c0_i32_1 = arith.constant 0 : i32
    return %c0_i32, %arg0, %c0_i32_0 : i32, i32, i32
  }
  func.func @transform_1(%arg0: i32) -> i32 {
    %c0_i32 = arith.constant 0 : i32
    %c0_i32_0 = arith.constant 0 : i32
    return %c0_i32 : i32
  }
  func.func @transform_2(%arg0: i32) -> i32 {
    %c0_i32 = arith.constant 0 : i32
    %c0_i32_0 = arith.constant 0 : i32
    return %c0_i32 : i32
  }
  func.func @transform_3(%arg0: i32) -> i32 {
    %c0_i32 = arith.constant 0 : i32
    %c0_i32_0 = arith.constant 0 : i32
    return %c0_i32 : i32
  }
  func.func @transform_4(%arg0: i32) -> i32 {
    %c0_i32 = arith.constant 0 : i32
    %c0_i32_0 = arith.constant 0 : i32
    return %c0_i32 : i32
  }
  func.func @transform_5(%arg0: i32) -> (i32, i32) {
    %c0_i32 = arith.constant 0 : i32
    %c0_i32_0 = arith.constant 0 : i32
    return %arg0, %c0_i32 : i32, i32
  }
}

</mosaic_0001>

<llo_original>
// kernel: tpu_custom_call.1
$region0: #{tpu_custom_call.1}
  #allocation0 [shape = 'u32[]', space=smem, size = 0x4, offset = 0x4, fixed_abs, tag = 'smem constant byte address 0x4 - core index']
  #allocation1 [shape = 'u32[72,128]{1,0:T(1,128)}', space=vmem, size = 0x9000, scoped, tag = 'internal scratch']
  #allocation2 [shape = 'f32[1]{0:T(128)S(6)}', space=smem, size = 0x200, scoped, tag = 'scoped memory for tpu_custom_call.1']
  %s0 = inlined_call_operand.hbm [shape: f32[3,16,128], index: 0, kind: input, shape index: {}]
  %s1 = inlined_call_operand.vmem [shape: f32[24], index: 1, kind: input, shape index: {}]
  %s2 = inlined_call_operand.vmem [shape: f32[8], index: 2, kind: input, shape index: {}]
  %s3 = inlined_call_operand.vmem [shape: f32[8], index: 3, kind: input, shape index: {}]
  %s4 = inlined_call_operand.<no memory space> [shape: f32[1], index: 4, kind: input, shape index: {}]
  %s5 = inlined_call_operand.hbm [shape: f32[16,128], index: 5, kind: output, shape index: {}]
  %s6 = sld [smem:[#allocation0]]
  $region69: #{tpu_custom_call.1} parent=0
    _
  %s8 = ssub.s32 1, %s6
  %s9 = scalar_select 0, %s8, %s6
  %10 = sst [smem:[#allocation2]] %s4
  $region1: #{tpu_custom_call.1} parent=0
    #allocation3 [shape = 'u8[24576]{0}', space=vmem, size = 0x6000, scoped, tag = 'input window, operand 0']
    #allocation4 [shape = 's32[2]{0}', space=sflag, size = 0x8, scoped, tag = 'scoped memory for tpu_custom_call.1']
    #allocation5 [shape = 's32[2]{0}', space=sflag, size = 0x8, scoped, tag = 'scoped memory for tpu_custom_call.1']
    #allocation6 [shape = 's32[2]{0}', space=sflag, size = 0x8, scoped, tag = 'scoped memory for tpu_custom_call.1']
    #allocation7 [shape = 'u8[512]{0}', space=smem, size = 0x200, scoped, tag = 'input window, operand 1, single buffered']
    #allocation8 [shape = 'u8[512]{0}', space=smem, size = 0x200, scoped, tag = 'input window, operand 2, single buffered']
    #allocation9 [shape = 's32[1]{0}', space=sflag, size = 0x4, scoped, tag = 'scoped memory for tpu_custom_call.1']
    #allocation10 [shape = 'u8[512]{0}', space=smem, size = 0x200, scoped, tag = 'input window, operand 3, single buffered']
    #allocation11 [shape = 'u8[8192]{0}', space=vmem, size = 0x2000, scoped, tag = 'output window, operand 0']
    %11 = vsyncpa [#allocation4], 0
    %s12 = scalar_lea.sflag [#allocation4], 1
    %13 = vsyncpa %s12, 0
    %14 = vsyncpa [#allocation6], 0
    %15 = vsyncpa [#allocation9], 0
    %16 = vsyncpa [#allocation5], 0
    %s17 = scalar_lea.sflag [#allocation5], 1
    %18 = vsyncpa %s17, 0
    loop: start=0, step=1, limit=4
    $region2: #{tpu_custom_call.1} parent=1 // loop_pre_header
      _
    $region3: #{tpu_custom_call.1} parent=1 // loop_header
      %s20 = sphi 0, %s24
      %p21 = scmp.ge.s32.totalorder %s20, 4
      %s30 = sphi 0, %s32
      %s33 = sphi 0, %s30
      %s34 = sphi 0, %s33
      %s50 = sphi 0, %s34
      %s54 = sphi 0, %s54
      %s56 = sphi 0, %s54
      %s57 = sphi 0, %s56
      %s71 = sphi 0, %s57
      %s75 = sphi 0, %s75
      %s77 = sphi 0, %s75
      %s78 = sphi 0, %s77
      %s92 = sphi 0, %s78
      %s96 = sphi 0, %s96
      %s98 = sphi 0, %s96
      %s99 = sphi 0, %s98
      %s113 = sphi 0, %s99
      %s117 = sphi 0, %s117
      %s119 = sphi 0, %s117
      %s120 = sphi 0, %s119
      %s134 = sphi 0, %s120
      %s140 = sphi 0, %s142
      %s143 = sphi 0, %s140
      %s144 = sphi 0, %s143
      %s160 = sphi 0, %s144
    $region4: #{tpu_custom_call.1} parent=1 // loop_header_branch
      %23 = sbr.rel (%p21) target = $region8
    $region5: #{tpu_custom_call.1} parent=1 // loop_body
      %s25 = ssub.s32 %s20, 1
      %s26 = ssub.s32 %s20, 2
      %s27 = sadd.s32 %s20, 1
      %s28 = ssub.s32 %s20, %s27
      %p29 = scmp.eq.s32.totalorder %s28, 0
      %s31 = sadd.s32 %s30, 1
      %s32 = scalar_select %p29, %s30, %s31
      %p35 = pneg %p29
      %p36 = scmp.eq.s32.totalorder %s20, 1
      %p37 = por %p35, %p36
      %p38 = scmp.ne.s32.totalorder %s30, %s33
      %p39 = scmp.eq.s32.totalorder %s20, 0
      %p40 = por %p38, %p39
      %p41 = scmp.ne.s32.totalorder %s30, %s33
      %p42 = scmp.eq.s32.totalorder %s25, 1
      %p43 = por %p41, %p42
      %p44 = scmp.ne.s32.totalorder %s33, %s34
      %p45 = scmp.eq.s32.totalorder %s25, 0
      %p46 = por %p44, %p45
      %p47 = scmp.ne.s32.totalorder %s33, %s34
      %p48 = scmp.eq.s32.totalorder %s26, 1
      %p49 = por %p47, %p48
      %p51 = scmp.ne.s32.totalorder %s34, %s50
      %p52 = scmp.eq.s32.totalorder %s26, 0
      %p53 = por %p51, %p52
      %s55 = sadd.s32 %s54, 1
      %p58 = scmp.eq.s32.totalorder %s20, 1
      %p59 = scmp.ne.s32.totalorder %s54, %s56
      %p60 = scmp.eq.s32.totalorder %s20, 0
      %p61 = por %p59, %p60
      %p62 = scmp.ne.s32.totalorder %s54, %s56
      %p63 = scmp.eq.s32.totalorder %s25, 1
      %p64 = por %p62, %p63
      %p65 = scmp.ne.s32.totalorder %s56, %s57
      %p66 = scmp.eq.s32.totalorder %s25, 0
      %p67 = por %p65, %p66
      %p68 = scmp.ne.s32.totalorder %s56, %s57
      %p69 = scmp.eq.s32.totalorder %s26, 1
      %p70 = por %p68, %p69
      %p72 = scmp.ne.s32.totalorder %s57, %s71
      %p73 = scmp.eq.s32.totalorder %s26, 0
      %p74 = por %p72, %p73
      %s76 = sadd.s32 %s75, 1
      %p79 = scmp.eq.s32.totalorder %s20, 1
      %p80 = scmp.ne.s32.totalorder %s75, %s77
      %p81 = scmp.eq.s32.totalorder %s20, 0
      %p82 = por %p80, %p81
      %p83 = scmp.ne.s32.totalorder %s75, %s77
      %p84 = scmp.eq.s32.totalorder %s25, 1
      %p85 = por %p83, %p84
      %p86 = scmp.ne.s32.totalorder %s77, %s78
      %p87 = scmp.eq.s32.totalorder %s25, 0
      %p88 = por %p86, %p87
      %p89 = scmp.ne.s32.totalorder %s77, %s78
      %p90 = scmp.eq.s32.totalorder %s26, 1
      %p91 = por %p89, %p90
      %p93 = scmp.ne.s32.totalorder %s78, %s92
      %p94 = scmp.eq.s32.totalorder %s26, 0
      %p95 = por %p93, %p94
      %s97 = sadd.s32 %s96, 1
      %p100 = scmp.eq.s32.totalorder %s20, 1
      %p101 = scmp.ne.s32.totalorder %s96, %s98
      %p102 = scmp.eq.s32.totalorder %s20, 0
      %p103 = por %p101, %p102
      %p104 = scmp.ne.s32.totalorder %s96, %s98
      %p105 = scmp.eq.s32.totalorder %s25, 1
      %p106 = por %p104, %p105
      %p107 = scmp.ne.s32.totalorder %s98, %s99
      %p108 = scmp.eq.s32.totalorder %s25, 0
      %p109 = por %p107, %p108
      %p110 = scmp.ne.s32.totalorder %s98, %s99
      %p111 = scmp.eq.s32.totalorder %s26, 1
      %p112 = por %p110, %p111
      %p114 = scmp.ne.s32.totalorder %s99, %s113
      %p115 = scmp.eq.s32.totalorder %s26, 0
      %p116 = por %p114, %p115
      %s118 = sadd.s32 %s117, 1
      %p121 = scmp.eq.s32.totalorder %s20, 1
      %p122 = scmp.ne.s32.totalorder %s117, %s119
      %p123 = scmp.eq.s32.totalorder %s20, 0
      %p124 = por %p122, %p123
      %p125 = scmp.ne.s32.totalorder %s117, %s119
      %p126 = scmp.eq.s32.totalorder %s25, 1
      %p127 = por %p125, %p126
      %p128 = scmp.ne.s32.totalorder %s119, %s120
      %p129 = scmp.eq.s32.totalorder %s25, 0
      %p130 = por %p128, %p129
      %p131 = scmp.ne.s32.totalorder %s119, %s120
      %p132 = scmp.eq.s32.totalorder %s26, 1
      %p133 = por %p131, %p132
      %p135 = scmp.ne.s32.totalorder %s120, %s134
      %p136 = scmp.eq.s32.totalorder %s26, 0
      %p137 = por %p135, %p136
      %s138 = ssub.s32 %s20, %s27
      %p139 = scmp.eq.s32.totalorder %s138, 0
      %s141 = sadd.s32 %s140, 1
      %s142 = scalar_select %p139, %s140, %s141
      %p145 = pneg %p139
      %p146 = scmp.eq.s32.totalorder %s20, 1
      %p147 = por %p145, %p146
      %p148 = scmp.ne.s32.totalorder %s140, %s143
      %p149 = scmp.eq.s32.totalorder %s20, 0
      %p150 = por %p148, %p149
      %p151 = scmp.ne.s32.totalorder %s140, %s143
      %p152 = scmp.eq.s32.totalorder %s25, 1
      %p153 = por %p151, %p152
      %p154 = scmp.ne.s32.totalorder %s143, %s144
      %p155 = scmp.eq.s32.totalorder %s25, 0
      %p156 = por %p154, %p155
      %p157 = scmp.ne.s32.totalorder %s143, %s144
      %p158 = scmp.eq.s32.totalorder %s26, 1
      %p159 = por %p157, %p158
      %p161 = scmp.ne.s32.totalorder %s144, %s160
      %p162 = scmp.eq.s32.totalorder %s26, 0
      %p163 = por %p161, %p162
      %p164 = scmp.le.s32.totalorder 1, %s20
      %p165 = scmp.lt.s32.totalorder %s20, 3
      %p166 = pnand %p164, %p165
      %p167 = pneg %p166
      // Predicated region
      $region9: #{tpu_custom_call.1} parent=5 // pred_check
        _
      $region10: #{tpu_custom_call.1} parent=5 // pred_check_branch
        %169 = sbr.rel (%p166) target = $region12
      $region11: #{tpu_custom_call.1} parent=5 // pred_region
        %s170 = ssub.s32 %s20, 1
        // Predicated region
        $region13: #{tpu_custom_call.1} parent=11 // pred_check
          %p171 = pneg %p67
        $region14: #{tpu_custom_call.1} parent=11 // pred_check_branch
          %173 = sbr.rel (%p171) target = $region16
        $region15: #{tpu_custom_call.1} parent=11 // pred_region
          %175 = vsyncadd [#allocation6], 0
          %s177 = sshll.u32 %s1, 4
          %s178 = int_to_ptr.vmem [resolvable:$true] %s177
          %180 = dma.vmem_to_smem %s178, 16, [#allocation7], [#allocation6]
        $region16: #{tpu_custom_call.1} parent=11 // pred_fallthru
          _
        // Predicated region
        $region17: #{tpu_custom_call.1} parent=11 // pred_check
          %p181 = pneg %p88
        $region18: #{tpu_custom_call.1} parent=11 // pred_check_branch
          %183 = sbr.rel (%p181) target = $region20
        $region19: #{tpu_custom_call.1} parent=11 // pred_region
          %185 = vsyncadd [#allocation9], 0
          %s187 = sshll.u32 %s2, 4
          %s188 = int_to_ptr.vmem [resolvable:$true] %s187
          %190 = dma.vmem_to_smem %s188, 16, [#allocation8], [#allocation9]
        $region20: #{tpu_custom_call.1} parent=11 // pred_fallthru
          _
        // Predicated region
        $region21: #{tpu_custom_call.1} parent=11 // pred_check
          %p191 = pneg %p109
        $region22: #{tpu_custom_call.1} parent=11 // pred_check_branch
          %193 = sbr.rel (%p191) target = $region24
        $region23: #{tpu_custom_call.1} parent=11 // pred_region
          %195 = vsyncadd [#allocation9], 0
          %s197 = sshll.u32 %s3, 4
          %s198 = int_to_ptr.vmem [resolvable:$true] %s197
          %200 = dma.vmem_to_smem %s198, 16, [#allocation10], [#allocation9]
        $region24: #{tpu_custom_call.1} parent=11 // pred_fallthru
          _
        // Predicated region
        $region25: #{tpu_custom_call.1} parent=11 // pred_check
          %p201 = pneg %p130
        $region26: #{tpu_custom_call.1} parent=11 // pred_check_branch
          %203 = sbr.rel (%p201) target = $region28
        $region27: #{tpu_custom_call.1} parent=11 // pred_region
          _
        $region28: #{tpu_custom_call.1} parent=11 // pred_fallthru
          _
      $region12: #{tpu_custom_call.1} parent=5 // pred_fallthru
        _
      %p204 = scmp.lt.s32.totalorder %s20, 2
      // Predicated region
      $region29: #{tpu_custom_call.1} parent=5 // pred_check
        %p205 = pneg %p204
      $region30: #{tpu_custom_call.1} parent=5 // pred_check_branch
        %207 = sbr.rel (%p205) target = $region32
      $region31: #{tpu_custom_call.1} parent=5 // pred_region
        // Predicated region
        $region33: #{tpu_custom_call.1} parent=31 // pred_check
          %p208 = pneg %p40
        $region34: #{tpu_custom_call.1} parent=31 // pred_check_branch
          %210 = sbr.rel (%p208) target = $region36
        $region35: #{tpu_custom_call.1} parent=31 // pred_region
          %s211 = sand.u32 %s30, 1
          %s212 = scalar_lea.sflag [#allocation4], %s211
          %s213 = sand.u32 %s30, 1
          %s214 = smul.addr %s213, 24
          %s215 = scalar_lea.vmem [#allocation3], %s214
          %217 = vsyncadd %s212, 0
          %s218 = smul.addr %s20, 8
          %s219 = scalar_lea.hbm %s0, %s218
          %s220 = sshll.u32 %s219, 4
          %s221 = int_to_ptr.hbm [resolvable:$true] %s220
          %s222 = sshll.u32 %s215, 4
          %s223 = int_to_ptr.vmem [resolvable:$true] %s222
          %228 = dma.hbm_to_vmem [thread:$0]  %s221, 384, %s223, %s212, 256, 128, 8
        $region36: #{tpu_custom_call.1} parent=31 // pred_fallthru
          _
      $region32: #{tpu_custom_call.1} parent=5 // pred_fallthru
        _
      %p229 = scmp.le.s32.totalorder 1, %s20
      %p230 = scmp.lt.s32.totalorder %s20, 3
      %p231 = pnand %p229, %p230
      %p232 = pneg %p231
      // Predicated region
      $region37: #{tpu_custom_call.1} parent=5 // pred_check
        _
      $region38: #{tpu_custom_call.1} parent=5 // pred_check_branch
        %234 = sbr.rel (%p231) target = $region40
      $region39: #{tpu_custom_call.1} parent=5 // pred_region
        %s235 = ssub.s32 %s20, 1
        %s236 = sand.u32 %s33, 1
        %s237 = scalar_lea.sflag [#allocation4], %s236
        %s238 = sand.u32 %s33, 1
        %s239 = smul.addr %s238, 24
        %s240 = scalar_lea.vmem [#allocation3], %s239
        // Predicated region
        $region41: #{tpu_custom_call.1} parent=39 // pred_check
          %p241 = pneg %p46
        $region42: #{tpu_custom_call.1} parent=39 // pred_check_branch
          %243 = sbr.rel (%p241) target = $region44
        $region43: #{tpu_custom_call.1} parent=39 // pred_region
          %245 = dma.done %s237, 384
        $region44: #{tpu_custom_call.1} parent=39 // pred_fallthru
          _
        // Predicated region
        $region45: #{tpu_custom_call.1} parent=39 // pred_check
          %p246 = pneg %p67
        $region46: #{tpu_custom_call.1} parent=39 // pred_check_branch
          %248 = sbr.rel (%p246) target = $region48
        $region47: #{tpu_custom_call.1} parent=39 // pred_region
          %250 = dma.done [#allocation6], 16
        $region48: #{tpu_custom_call.1} parent=39 // pred_fallthru
          _
        // Predicated region
        $region49: #{tpu_custom_call.1} parent=39 // pred_check
          %p251 = pneg %p88
        $region50: #{tpu_custom_call.1} parent=39 // pred_check_branch
          %253 = sbr.rel (%p251) target = $region52
        $region51: #{tpu_custom_call.1} parent=39 // pred_region
          %255 = dma.done [#allocation9], 16
        $region52: #{tpu_custom_call.1} parent=39 // pred_fallthru
          _
        // Predicated region
        $region53: #{tpu_custom_call.1} parent=39 // pred_check
          %p256 = pneg %p109
        $region54: #{tpu_custom_call.1} parent=39 // pred_check_branch
          %258 = sbr.rel (%p256) target = $region56
        $region55: #{tpu_custom_call.1} parent=39 // pred_region
          %260 = dma.done [#allocation9], 16
        $region56: #{tpu_custom_call.1} parent=39 // pred_fallthru
          _
        %261 = sfence
        %s262 = sand.u32 %s33, 1
        %s263 = scalar_lea.sflag [#allocation4], %s262
        %s264 = sand.u32 %s33, 1
        %s265 = smul.addr %s264, 24
        %s266 = scalar_lea.vmem [#allocation3], %s265
        %p267 = pneg %p46
        %p268 = pneg %p43
        %p269 = pneg %p67
        %p270 = pneg %p64
        %p271 = pneg %p88
        %p272 = pneg %p85
        %p273 = pneg %p109
        %p274 = pneg %p106
        %p275 = pneg %p130
        %p276 = pneg %p127
        %p277 = pneg %p156
        %p278 = pneg %p153
        %s279 = sand.u32 %s143, 1
        %s280 = scalar_lea.sflag [#allocation5], %s279
        %s281 = sand.u32 %s143, 1
        %s282 = smul.addr %s281, 8
        %s283 = scalar_lea.vmem [#allocation11], %s282
        %v284 = vld [vmem:[%s240] sm:$0xff]
        %s285 = scalar_lea.vmem %s240, 8 [#allocation3]
        %v286 = vld [vmem:[%s285] sm:$0xff]
        %s287 = scalar_lea.vmem %s240, 16 [#allocation3]
        %v288 = vld [vmem:[%s287] sm:$0xff]
        %s289 = sld [smem:[#allocation7]]
        %v290 = vstv %s289
        %v291 = vmul.f32 %v284, %v290
        %s292 = sld [smem:[#allocation7 + $0x8]]
        %v293 = vstv %s292
        %v294 = vmul.f32 %v286, %v293
        %v295 = vadd.f32 %v291, %v294
        %s296 = sld [smem:[#allocation7 + $0x10]]
        %v297 = vstv %s296
        %v298 = vmul.f32 %v288, %v297
        %v299 = vadd.f32 %v295, %v298
        %s300 = sld [smem:[#allocation8]]
        %v301 = vstv %s300
        %v302 = vadd.f32 %v299, %v301
        %v303 = vmax.f32 %v302, 0.0
        %s304 = sld [smem:[#allocation10]]
        %v305 = vstv %s304
        %v306 = vmul.f32 %v303, %v305
        %s307 = sld [smem:[#allocation7 + $0x1]]
        %v308 = vstv %s307
        %v309 = vmul.f32 %v284, %v308
        %s310 = sld [smem:[#allocation7 + $0x9]]
        %v311 = vstv %s310
        %v312 = vmul.f32 %v286, %v311
        %v313 = vadd.f32 %v309, %v312
        %s314 = sld [smem:[#allocation7 + $0x11]]
        %v315 = vstv %s314
        %v316 = vmul.f32 %v288, %v315
        %v317 = vadd.f32 %v313, %v316
        %s318 = sld [smem:[#allocation8 + $0x1]]
        %v319 = vstv %s318
        %v320 = vadd.f32 %v317, %v319
        %v321 = vmax.f32 %v320, 0.0
        %s322 = sld [smem:[#allocation10 + $0x1]]
        %v323 = vstv %s322
        %v324 = vmul.f32 %v321, %v323
        %v325 = vadd.f32 %v306, %v324
        %s326 = sld [smem:[#allocation7 + $0x2]]
        %v327 = vstv %s326
        %v328 = vmul.f32 %v284, %v327
        %s329 = sld [smem:[#allocation7 + $0xa]]
        %v330 = vstv %s329
        %v331 = vmul.f32 %v286, %v330
        %v332 = vadd.f32 %v328, %v331
        %s333 = sld [smem:[#allocation7 + $0x12]]
        %v334 = vstv %s333
        %v335 = vmul.f32 %v288, %v334
        %v336 = vadd.f32 %v332, %v335
        %s337 = sld [smem:[#allocation8 + $0x2]]
        %v338 = vstv %s337
        %v339 = vadd.f32 %v336, %v338
        %v340 = vmax.f32 %v339, 0.0
        %s341 = sld [smem:[#allocation10 + $0x2]]
        %v342 = vstv %s341
        %v343 = vmul.f32 %v340, %v342
        %v344 = vadd.f32 %v325, %v343
        %s345 = sld [smem:[#allocation7 + $0x3]]
        %v346 = vstv %s345
        %v347 = vmul.f32 %v284, %v346
        %s348 = sld [smem:[#allocation7 + $0xb]]
        %v349 = vstv %s348
        %v350 = vmul.f32 %v286, %v349
        %v351 = vadd.f32 %v347, %v350
        %s352 = sld [smem:[#allocation7 + $0x13]]
        %v353 = vstv %s352
        %v354 = vmul.f32 %v288, %v353
        %v355 = vadd.f32 %v351, %v354
        %s356 = sld [smem:[#allocation8 + $0x3]]
        %v357 = vstv %s356
        %v358 = vadd.f32 %v355, %v357
        %v359 = vmax.f32 %v358, 0.0
        %s360 = sld [smem:[#allocation10 + $0x3]]
        %v361 = vstv %s360
        %v362 = vmul.f32 %v359, %v361
        %v363 = vadd.f32 %v344, %v362
        %s364 = sld [smem:[#allocation7 + $0x4]]
        %v365 = vstv %s364
        %v366 = vmul.f32 %v284, %v365
        %s367 = sld [smem:[#allocation7 + $0xc]]
        %v368 = vstv %s367
        %v369 = vmul.f32 %v286, %v368
        %v370 = vadd.f32 %v366, %v369
        %s371 = sld [smem:[#allocation7 + $0x14]]
        %v372 = vstv %s371
        %v373 = vmul.f32 %v288, %v372
        %v374 = vadd.f32 %v370, %v373
        %s375 = sld [smem:[#allocation8 + $0x4]]
        %v376 = vstv %s375
        %v377 = vadd.f32 %v374, %v376
        %v378 = vmax.f32 %v377, 0.0
        %s379 = sld [smem:[#allocation10 + $0x4]]
        %v380 = vstv %s379
        %v381 = vmul.f32 %v378, %v380
        %v382 = vadd.f32 %v363, %v381
        %s383 = sld [smem:[#allocation7 + $0x5]]
        %v384 = vstv %s383
        %v385 = vmul.f32 %v284, %v384
        %s386 = sld [smem:[#allocation7 + $0xd]]
        %v387 = vstv %s386
        %v388 = vmul.f32 %v286, %v387
        %v389 = vadd.f32 %v385, %v388
        %s390 = sld [smem:[#allocation7 + $0x15]]
        %v391 = vstv %s390
        %v392 = vmul.f32 %v288, %v391
        %v393 = vadd.f32 %v389, %v392
        %s394 = sld [smem:[#allocation8 + $0x5]]
        %v395 = vstv %s394
        %v396 = vadd.f32 %v393, %v395
        %v397 = vmax.f32 %v396, 0.0
        %s398 = sld [smem:[#allocation10 + $0x5]]
        %v399 = vstv %s398
        %v400 = vmul.f32 %v397, %v399
        %v401 = vadd.f32 %v382, %v400
        %s402 = sld [smem:[#allocation7 + $0x6]]
        %v403 = vstv %s402
        %v404 = vmul.f32 %v284, %v403
        %s405 = sld [smem:[#allocation7 + $0xe]]
        %v406 = vstv %s405
        %v407 = vmul.f32 %v286, %v406
        %v408 = vadd.f32 %v404, %v407
        %s409 = sld [smem:[#allocation7 + $0x16]]
        %v410 = vstv %s409
        %v411 = vmul.f32 %v288, %v410
        %v412 = vadd.f32 %v408, %v411
        %s413 = sld [smem:[#allocation8 + $0x6]]
        %v414 = vstv %s413
        %v415 = vadd.f32 %v412, %v414
        %v416 = vmax.f32 %v415, 0.0
        %s417 = sld [smem:[#allocation10 + $0x6]]
        %v418 = vstv %s417
        %v419 = vmul.f32 %v416, %v418
        %v420 = vadd.f32 %v401, %v419
        %s421 = sld [smem:[#allocation7 + $0x7]]
        %v422 = vstv %s421
        %v423 = vmul.f32 %v284, %v422
        %s424 = sld [smem:[#allocation7 + $0xf]]
        %v425 = vstv %s424
        %v426 = vmul.f32 %v286, %v425
        %v427 = vadd.f32 %v423, %v426
        %s428 = sld [smem:[#allocation7 + $0x17]]
        %v429 = vstv %s428
        %v430 = vmul.f32 %v288, %v429
        %v431 = vadd.f32 %v427, %v430
        %s432 = sld [smem:[#allocation8 + $0x7]]
        %v433 = vstv %s432
        %v434 = vadd.f32 %v431, %v433
        %v435 = vmax.f32 %v434, 0.0
        %s436 = sld [smem:[#allocation10 + $0x7]]
        %v437 = vstv %s436
        %v438 = vmul.f32 %v435, %v437
        %v439 = vadd.f32 %v420, %v438
        %s440 = sld [smem:[#allocation2]]
        %v441 = vstv %s440
        %v442 = vadd.f32 %v439, %v441
        %443 = vst [vmem:[%s283] sm:$0xff] %v442
        %s444 = sand.u32 %s143, 1
        %s445 = scalar_lea.sflag [#allocation5], %s444
        %s446 = sand.u32 %s143, 1
        %s447 = smul.addr %s446, 8
        %s448 = scalar_lea.vmem [#allocation11], %s447
        // Predicated region
        $region57: #{tpu_custom_call.1} parent=39 // pred_check
          %p449 = pneg %p153
        $region58: #{tpu_custom_call.1} parent=39 // pred_check_branch
          %451 = sbr.rel (%p449) target = $region60
        $region59: #{tpu_custom_call.1} parent=39 // pred_region
          %453 = vsyncadd %s445, 0
          %s454 = smul.addr %s25, 8
          %s455 = scalar_lea.hbm %s5, %s454
          %s457 = sshll.u32 %s448, 4
          %s458 = int_to_ptr.vmem [resolvable:$true] %s457
          %s459 = sshll.u32 %s455, 4
          %s460 = int_to_ptr.hbm [resolvable:$true] %s459
          %462 = dma.vmem_to_hbm [thread:$0]  %s458, 128, %s460, %s445
        $region60: #{tpu_custom_call.1} parent=39 // pred_fallthru
          _
      $region40: #{tpu_custom_call.1} parent=5 // pred_fallthru
        _
      %p463 = scmp.le.s32.totalorder 2, %s20
      // Predicated region
      $region61: #{tpu_custom_call.1} parent=5 // pred_check
        %p464 = pneg %p463
      $region62: #{tpu_custom_call.1} parent=5 // pred_check_branch
        %466 = sbr.rel (%p464) target = $region64
      $region63: #{tpu_custom_call.1} parent=5 // pred_region
        %s467 = ssub.s32 %s20, 2
        // Predicated region
        $region65: #{tpu_custom_call.1} parent=63 // pred_check
          %p468 = pneg %p159
        $region66: #{tpu_custom_call.1} parent=63 // pred_check_branch
          %470 = sbr.rel (%p468) target = $region68
        $region67: #{tpu_custom_call.1} parent=63 // pred_region
          %s471 = sand.u32 %s144, 1
          %s472 = scalar_lea.sflag [#allocation5], %s471
          %s473 = sand.u32 %s144, 1
          %s474 = smul.addr %s473, 8
          %s475 = scalar_lea.vmem [#allocation11], %s474
          %477 = dma.done %s472, 128
        $region68: #{tpu_custom_call.1} parent=63 // pred_fallthru
          _
      $region64: #{tpu_custom_call.1} parent=5 // pred_fallthru
        _
    $region6: #{tpu_custom_call.1} parent=1 // loop_footer
      %s24 = sadd.s32 1, %s20
    $region7: #{tpu_custom_call.1} parent=1 // loop_footer_branch
      %19 = sbr.rel target = $region3
    $region8: #{tpu_custom_call.1} parent=1 // loop_exit
      _
    %478 = vsyncpa [#allocation4], 1
    %s479 = scalar_lea.sflag [#allocation4], 1
    %480 = vsyncpa %s479, 1
    %481 = vsyncpa [#allocation5], 1
    %s482 = scalar_lea.sflag [#allocation5], 1
    %483 = vsyncpa %s482, 1
    %484 = vsyncpa [#allocation6], 1
    %s485 = scalar_lea.sflag [#allocation6], 1
    %486 = vsyncpa %s485, 1
    %487 = vsyncpa [#allocation9], 1

</llo_original>
